<compile_context>
chip_gen: v6e
topology: v6e:2x2x1
jax: 0.10.0
libtpu: 0.0.40
codegen_flags: <defaults>
</compile_context>

<pallas_src>
import functools

import jax
import jax.numpy as jnp
from jax.experimental import pallas as pl
from jax.experimental.pallas import tpu as pltpu


def _round_up(n: int, m: int) -> int:
    return ((n + m - 1) // m) * m


def _policy_kernel(x_ref,
                   w1_ref, b1_ref,
                   w2_ref, b2_ref,
                   w3_ref, b3_ref,
                   w4_ref, b4_ref,
                   out_ref):
    # x tile / weights are bf16 (MXU-native); accumulate f32; bias/ReLU in f32.
    h = jnp.dot(x_ref[...], w1_ref[...], preferred_element_type=jnp.float32)
    h = jnp.maximum(h + b1_ref[...], 0.0)

    h = jnp.dot(h.astype(jnp.bfloat16), w2_ref[...],
                preferred_element_type=jnp.float32)
    h = jnp.maximum(h + b2_ref[...], 0.0)

    h = jnp.dot(h.astype(jnp.bfloat16), w3_ref[...],
                preferred_element_type=jnp.float32)
    h = jnp.maximum(h + b3_ref[...], 0.0)

    y = jnp.dot(h.astype(jnp.bfloat16), w4_ref[...],
                preferred_element_type=jnp.float32) + b4_ref[...]
    out_ref[...] = y.astype(out_ref.dtype)   # lane-dense (TB, 128*k) store


@functools.partial(jax.jit, static_argnames=("tb",))
def policy_forward(x, params, *, tb=256):
    """x: (B, input_size) float32. params: w1..w4 (in,out), b1..b4 (1,out) f32."""
    B, in_size = x.shape
    num_actions = params["w4"].shape[1]
    na_pad = _round_up(num_actions, 128)       # lane-dense output width

    # Batch tile: multiple of 8 sublanes, capped at the (padded) batch.
    # TB=256 keeps 2x double-buffered tiles + resident weights far below the
    # v7x 64 MiB VMEM budget (and therefore also fits v5e/v6e).
    tb = _round_up(max(tb, 8), 8)
    tb = min(tb, _round_up(B, 8))
    b_pad = _round_up(B, tb)
    grid = (b_pad // tb,)

    # Operand prep: zero-pad batch / actions, bf16 weights & activations,
    # biases stay f32 (added after the f32-accumulated matmul).
    x_p = jnp.pad(x.astype(jnp.bfloat16), ((0, b_pad - B), (0, 0)))
    w1 = params["w1"].astype(jnp.bfloat16)
    w2 = params["w2"].astype(jnp.bfloat16)
    w3 = params["w3"].astype(jnp.bfloat16)
    w4 = jnp.pad(params["w4"],
                 ((0, 0), (0, na_pad - num_actions))).astype(jnp.bfloat16)
    b1 = params["b1"].astype(jnp.float32)
    b2 = params["b2"].astype(jnp.float32)
    b3 = params["b3"].astype(jnp.float32)
    b4 = jnp.pad(params["b4"],
                 ((0, 0), (0, na_pad - num_actions))).astype(jnp.float32)

    # Weights / biases: constant block index -> stay resident in VMEM.
    resident = lambda a: pl.BlockSpec(a.shape, lambda i: (0, 0))
    in_specs = [
        pl.BlockSpec((tb, in_size), lambda i: (i, 0)),   # x: tiled over batch
        resident(w1), resident(b1),
        resident(w2), resident(b2),
        resident(w3), resident(b3),
        resident(w4), resident(b4),
    ]
    out_spec = pl.BlockSpec((tb, na_pad), lambda i: (i, 0))

    flops = 2 * b_pad * (in_size * 64 + 64 * 128 + 128 * 64 + 64 * na_pad)
    weight_bytes = sum(int(a.size) * a.dtype.itemsize
                       for a in (w1, b1, w2, b2, w3, b3, w4, b4))
    bytes_accessed = int(x_p.size) * 2 + b_pad * na_pad * 4 + weight_bytes

    out_padded = pl.pallas_call(
        _policy_kernel,
        out_shape=jax.ShapeDtypeStruct((b_pad, na_pad), jnp.float32),
        grid_spec=pltpu.PrefetchScalarGridSpec(
            num_scalar_prefetch=0,
            grid=grid,
            in_specs=in_specs,
            out_specs=out_spec,
        ),
        compiler_params=pltpu.CompilerParams(
            dimension_semantics=("parallel",),   # megacore sharding on v7x
        ),
        cost_estimate=pl.CostEstimate(
            flops=flops, transcendentals=0, bytes_accessed=bytes_accessed),
    )(x_p, w1, b1, w2, b2, w3, b3, w4, b4)

    return out_padded[:B, :num_actions]


def init_params(key, input_size, num_actions):
    """Deterministic init mimicking nn.Linear's U(-1/sqrt(fan_in), 1/sqrt(fan_in))."""
    dims = [(input_size, 64), (64, 128), (128, 64), (64, num_actions)]
    params = {}
    for i, (fan_in, fan_out) in enumerate(dims, start=1):
        key, kw, kb = jax.random.split(key, 3)
        bound = 1.0 / jnp.sqrt(jnp.float32(fan_in))
        params[f"w{i}"] = jax.random.uniform(
            kw, (fan_in, fan_out), jnp.float32, -bound, bound)
        params[f"b{i}"] = jax.random.uniform(
            kb, (1, fan_out), jnp.float32, -bound, bound)
    return params


def reference_forward(x, params):
    """Pure-JAX reference with the same bf16-operand / f32-accumulate recipe."""
    def lin(h, w, b):
        return jnp.dot(h.astype(jnp.bfloat16), w.astype(jnp.bfloat16),
                       preferred_element_type=jnp.float32) + b
    h = jnp.maximum(lin(x, params["w1"], params["b1"]), 0.0)
    h = jnp.maximum(lin(h, params["w2"], params["b2"]), 0.0)
    h = jnp.maximum(lin(h, params["w3"], params["b3"]), 0.0)
    return lin(h, params["w4"], params["b4"])


if __name__ == "__main__":
    key = jax.random.PRNGKey(0)
    batch = 2
    input_size = 8
    num_actions = 4

    key, kx = jax.random.split(key)
    x = jax.random.normal(kx, (batch, input_size), jnp.float32)
    params = init_params(key, input_size, num_actions)

    out = policy_forward(x, params)
    out = jax.block_until_ready(out)

    ref = reference_forward(x, params)
    assert out.shape == (batch, num_actions)
    assert jnp.allclose(out, ref, atol=1e-3, rtol=1e-3), "mismatch vs reference"

    print("KERNEL_OK")
</pallas_src>

<mosaic_0001>
module attributes {stable_mosaic.version = 11 : i64} {
  func.func @_policy_kernel(%arg0: i32, %arg1: memref<8x8xbf16, #tpu.memory_space<vmem>>, %arg2: memref<8x64xbf16, #tpu.memory_space<vmem>>, %arg3: memref<1x64xf32, #tpu.memory_space<vmem>>, %arg4: memref<64x128xbf16, #tpu.memory_space<vmem>>, %arg5: memref<1x128xf32, #tpu.memory_space<vmem>>, %arg6: memref<128x64xbf16, #tpu.memory_space<vmem>>, %arg7: memref<1x64xf32, #tpu.memory_space<vmem>>, %arg8: memref<64x128xbf16, #tpu.memory_space<vmem>>, %arg9: memref<1x128xf32, #tpu.memory_space<vmem>>, %arg10: memref<8x128xf32, #tpu.memory_space<vmem>>) attributes {dimension_semantics = [#tpu.dimension_semantics<parallel>], iteration_bounds = array<i64: 1>, scalar_prefetch = 0 : i64, scratch_operands = 0 : i64, tpu.core_type = #tpu.core_type<tc>, window_params = [{transform_indices = @transform_0, window_bounds = array<i64: 8, 8>}, {pipeline_mode = #tpu.pipeline_mode<synchronous>, transform_indices = @transform_1, window_bounds = array<i64: 8, 64>}, {pipeline_mode = #tpu.pipeline_mode<synchronous>, transform_indices = @transform_2, window_bounds = array<i64: 1, 64>}, {pipeline_mode = #tpu.pipeline_mode<synchronous>, transform_indices = @transform_3, window_bounds = array<i64: 64, 128>}, {pipeline_mode = #tpu.pipeline_mode<synchronous>, transform_indices = @transform_4, window_bounds = array<i64: 1, 128>}, {pipeline_mode = #tpu.pipeline_mode<synchronous>, transform_indices = @transform_5, window_bounds = array<i64: 128, 64>}, {pipeline_mode = #tpu.pipeline_mode<synchronous>, transform_indices = @transform_6, window_bounds = array<i64: 1, 64>}, {pipeline_mode = #tpu.pipeline_mode<synchronous>, transform_indices = @transform_7, window_bounds = array<i64: 64, 128>}, {pipeline_mode = #tpu.pipeline_mode<synchronous>, transform_indices = @transform_8, window_bounds = array<i64: 1, 128>}, {transform_indices = @transform_9, window_bounds = array<i64: 8, 128>}]} {
    %c0 = arith.constant 0 : index
    %c0_0 = arith.constant 0 : index
    %0 = vector.load %arg1[%c0, %c0_0] : memref<8x8xbf16, #tpu.memory_space<vmem>>, vector<8x8xbf16>
    %c0_1 = arith.constant 0 : index
    %c0_2 = arith.constant 0 : index
    %1 = vector.load %arg2[%c0_1, %c0_2] : memref<8x64xbf16, #tpu.memory_space<vmem>>, vector<8x64xbf16>
    %cst = arith.constant dense<0.000000e+00> : vector<8x64xf32>
    %2 = tpu.matmul %0, %1, %cst {dimension_numbers = #tpu.dot_dimension_numbers<[1], [0], [0], [1], [0, 0, 1, 1], [], []>} : vector<8x8xbf16>, vector<8x64xbf16>, vector<8x64xf32> -> vector<8x64xf32>
    %c0_3 = arith.constant 0 : index
    %c0_4 = arith.constant 0 : index
    %3 = vector.load %arg3[%c0_3, %c0_4] : memref<1x64xf32, #tpu.memory_space<vmem>>, vector<1x64xf32>
    %4 = vector.broadcast %3 : vector<1x64xf32> to vector<8x64xf32>
    %5 = arith.addf %2, %4 : vector<8x64xf32>
    %cst_5 = arith.constant 0.000000e+00 : f32
    %6 = vector.broadcast %cst_5 : f32 to vector<8x64xf32>
    %7 = arith.maximumf %5, %6 : vector<8x64xf32>
    %8 = arith.truncf %7 : vector<8x64xf32> to vector<8x64xbf16>
    %c0_6 = arith.constant 0 : index
    %c0_7 = arith.constant 0 : index
    %9 = vector.load %arg4[%c0_6, %c0_7] : memref<64x128xbf16, #tpu.memory_space<vmem>>, vector<64x128xbf16>
    %cst_8 = arith.constant dense<0.000000e+00> : vector<8x128xf32>
    %10 = tpu.matmul %8, %9, %cst_8 {dimension_numbers = #tpu.dot_dimension_numbers<[1], [0], [0], [1], [0, 0, 1, 1], [], []>} : vector<8x64xbf16>, vector<64x128xbf16>, vector<8x128xf32> -> vector<8x128xf32>
    %c0_9 = arith.constant 0 : index
    %c0_10 = arith.constant 0 : index
    %11 = vector.load %arg5[%c0_9, %c0_10] : memref<1x128xf32, #tpu.memory_space<vmem>>, vector<1x128xf32>
    %12 = vector.broadcast %11 : vector<1x128xf32> to vector<8x128xf32>
    %13 = arith.addf %10, %12 : vector<8x128xf32>
    %cst_11 = arith.constant 0.000000e+00 : f32
    %14 = vector.broadcast %cst_11 : f32 to vector<8x128xf32>
    %15 = arith.maximumf %13, %14 : vector<8x128xf32>
    %16 = arith.truncf %15 : vector<8x128xf32> to vector<8x128xbf16>
    %c0_12 = arith.constant 0 : index
    %c0_13 = arith.constant 0 : index
    %17 = vector.load %arg6[%c0_12, %c0_13] : memref<128x64xbf16, #tpu.memory_space<vmem>>, vector<128x64xbf16>
    %cst_14 = arith.constant dense<0.000000e+00> : vector<8x64xf32>
    %18 = tpu.matmul %16, %17, %cst_14 {dimension_numbers = #tpu.dot_dimension_numbers<[1], [0], [0], [1], [0, 0, 1, 1], [], []>} : vector<8x128xbf16>, vector<128x64xbf16>, vector<8x64xf32> -> vector<8x64xf32>
    %c0_15 = arith.constant 0 : index
    %c0_16 = arith.constant 0 : index
    %19 = vector.load %arg7[%c0_15, %c0_16] : memref<1x64xf32, #tpu.memory_space<vmem>>, vector<1x64xf32>
    %20 = vector.broadcast %19 : vector<1x64xf32> to vector<8x64xf32>
    %21 = arith.addf %18, %20 : vector<8x64xf32>
    %cst_17 = arith.constant 0.000000e+00 : f32
    %22 = vector.broadcast %cst_17 : f32 to vector<8x64xf32>
    %23 = arith.maximumf %21, %22 : vector<8x64xf32>
    %24 = arith.truncf %23 : vector<8x64xf32> to vector<8x64xbf16>
    %c0_18 = arith.constant 0 : index
    %c0_19 = arith.constant 0 : index
    %25 = vector.load %arg8[%c0_18, %c0_19] : memref<64x128xbf16, #tpu.memory_space<vmem>>, vector<64x128xbf16>
    %cst_20 = arith.constant dense<0.000000e+00> : vector<8x128xf32>
    %26 = tpu.matmul %24, %25, %cst_20 {dimension_numbers = #tpu.dot_dimension_numbers<[1], [0], [0], [1], [0, 0, 1, 1], [], []>} : vector<8x64xbf16>, vector<64x128xbf16>, vector<8x128xf32> -> vector<8x128xf32>
    %c0_21 = arith.constant 0 : index
    %c0_22 = arith.constant 0 : index
    %27 = vector.load %arg9[%c0_21, %c0_22] : memref<1x128xf32, #tpu.memory_space<vmem>>, vector<1x128xf32>
    %28 = vector.broadcast %27 : vector<1x128xf32> to vector<8x128xf32>
    %29 = arith.addf %26, %28 : vector<8x128xf32>
    %c0_23 = arith.constant 0 : index
    %c0_24 = arith.constant 0 : index
    %30 = vector.load %arg10[%c0_23, %c0_24] : memref<8x128xf32, #tpu.memory_space<vmem>>, vector<8x128xf32>
    tpu.vector_store %arg10[%c0_23, %c0_24], %29 {strides = array<i32>} : memref<8x128xf32, #tpu.memory_space<vmem>>, vector<8x128xf32>,
    return
  }
  func.func @transform_0(%arg0: i32) -> (i32, i32) {
    %c0_i32 = arith.constant 0 : i32
    %c0_i32_0 = arith.constant 0 : i32
    return %arg0, %c0_i32 : i32, i32
  }
  func.func @transform_1(%arg0: i32) -> (i32, i32) {
    %c0_i32 = arith.constant 0 : i32
    %c0_i32_0 = arith.constant 0 : i32
    %c0_i32_1 = arith.constant 0 : i32
    return %c0_i32, %c0_i32_0 : i32, i32
  }
  func.func @transform_2(%arg0: i32) -> (i32, i32) {
    %c0_i32 = arith.constant 0 : i32
    %c0_i32_0 = arith.constant 0 : i32
    %c0_i32_1 = arith.constant 0 : i32
    return %c0_i32, %c0_i32_0 : i32, i32
  }
  func.func @transform_3(%arg0: i32) -> (i32, i32) {
    %c0_i32 = arith.constant 0 : i32
    %c0_i32_0 = arith.constant 0 : i32
    %c0_i32_1 = arith.constant 0 : i32
    return %c0_i32, %c0_i32_0 : i32, i32
  }
  func.func @transform_4(%arg0: i32) -> (i32, i32) {
    %c0_i32 = arith.constant 0 : i32
    %c0_i32_0 = arith.constant 0 : i32
    %c0_i32_1 = arith.constant 0 : i32
    return %c0_i32, %c0_i32_0 : i32, i32
  }
  func.func @transform_5(%arg0: i32) -> (i32, i32) {
    %c0_i32 = arith.constant 0 : i32
    %c0_i32_0 = arith.constant 0 : i32
    %c0_i32_1 = arith.constant 0 : i32
    return %c0_i32, %c0_i32_0 : i32, i32
  }
  func.func @transform_6(%arg0: i32) -> (i32, i32) {
    %c0_i32 = arith.constant 0 : i32
    %c0_i32_0 = arith.constant 0 : i32
    %c0_i32_1 = arith.constant 0 : i32
    return %c0_i32, %c0_i32_0 : i32, i32
  }
  func.func @transform_7(%arg0: i32) -> (i32, i32) {
    %c0_i32 = arith.constant 0 : i32
    %c0_i32_0 = arith.constant 0 : i32
    %c0_i32_1 = arith.constant 0 : i32
    return %c0_i32, %c0_i32_0 : i32, i32
  }
  func.func @transform_8(%arg0: i32) -> (i32, i32) {
    %c0_i32 = arith.constant 0 : i32
    %c0_i32_0 = arith.constant 0 : i32
    %c0_i32_1 = arith.constant 0 : i32
    return %c0_i32, %c0_i32_0 : i32, i32
  }
  func.func @transform_9(%arg0: i32) -> (i32, i32) {
    %c0_i32 = arith.constant 0 : i32
    %c0_i32_0 = arith.constant 0 : i32
    return %arg0, %c0_i32 : i32, i32
  }
}

</mosaic_0001>

<llo_original>
// kernel: policy_forward.1
$region0: #{policy_forward.1}
  #allocation0 [shape = 'u32[]', space=smem, size = 0x4, offset = 0x4, fixed_abs, tag = 'smem constant byte address 0x4 - core index']
  #allocation1 [shape = 'u32[144,128]{1,0:T(1,128)}', space=vmem, size = 0x12000, scoped, tag = 'internal scratch']
  %s0 = inlined_call_operand.vmem [shape: bf16[8,8], index: 0, kind: input, shape index: {}]
  %s1 = inlined_call_operand.vmem [shape: bf16[8,64], index: 1, kind: input, shape index: {}]
  %s2 = inlined_call_operand.vmem [shape: f32[1,64], index: 2, kind: input, shape index: {}]
  %s3 = inlined_call_operand.vmem [shape: bf16[64,128], index: 3, kind: input, shape index: {}]
  %s4 = inlined_call_operand.vmem [shape: f32[1,128], index: 4, kind: input, shape index: {}]
  %s5 = inlined_call_operand.vmem [shape: bf16[128,64], index: 5, kind: input, shape index: {}]
  %s6 = inlined_call_operand.vmem [shape: f32[1,64], index: 6, kind: input, shape index: {}]
  %s7 = inlined_call_operand.vmem [shape: bf16[64,128], index: 7, kind: input, shape index: {}]
  %s8 = inlined_call_operand.vmem [shape: f32[1,128], index: 8, kind: input, shape index: {}]
  %s9 = inlined_call_operand.vmem [shape: f32[8,128], index: 9, kind: output, shape index: {}]
  %s10 = sld [smem:[#allocation0]]
  $region46: #{policy_forward.1} parent=0
    _
  %s12 = ssub.s32 1, %s10
  %s13 = scalar_select 0, %s12, %s10
  // Predicated region
  $region2: #{policy_forward.1} parent=0 // pred_check
    _
  $region3: #{policy_forward.1} parent=0 // pred_check_branch
    %15 = sbr.rel (0) target = $region5
  $region4: #{policy_forward.1} parent=0 // pred_region
    _
  $region5: #{policy_forward.1} parent=0 // pred_fallthru
    _
  // Predicated region
  $region6: #{policy_forward.1} parent=0 // pred_check
    _
  $region7: #{policy_forward.1} parent=0 // pred_check_branch
    %17 = sbr.rel (0) target = $region9
  $region8: #{policy_forward.1} parent=0 // pred_region
    _
  $region9: #{policy_forward.1} parent=0 // pred_fallthru
    _
  // Predicated region
  $region10: #{policy_forward.1} parent=0 // pred_check
    _
  $region11: #{policy_forward.1} parent=0 // pred_check_branch
    %19 = sbr.rel (0) target = $region13
  $region12: #{policy_forward.1} parent=0 // pred_region
    _
  $region13: #{policy_forward.1} parent=0 // pred_fallthru
    _
  // Predicated region
  $region14: #{policy_forward.1} parent=0 // pred_check
    _
  $region15: #{policy_forward.1} parent=0 // pred_check_branch
    %21 = sbr.rel (0) target = $region17
  $region16: #{policy_forward.1} parent=0 // pred_region
    _
  $region17: #{policy_forward.1} parent=0 // pred_fallthru
    _
  // Predicated region
  $region18: #{policy_forward.1} parent=0 // pred_check
    _
  $region19: #{policy_forward.1} parent=0 // pred_check_branch
    %23 = sbr.rel (0) target = $region21
  $region20: #{policy_forward.1} parent=0 // pred_region
    _
  $region21: #{policy_forward.1} parent=0 // pred_fallthru
    _
  // Predicated region
  $region22: #{policy_forward.1} parent=0 // pred_check
    _
  $region23: #{policy_forward.1} parent=0 // pred_check_branch
    %25 = sbr.rel (0) target = $region25
  $region24: #{policy_forward.1} parent=0 // pred_region
    _
  $region25: #{policy_forward.1} parent=0 // pred_fallthru
    _
  // Predicated region
  $region26: #{policy_forward.1} parent=0 // pred_check
    _
  $region27: #{policy_forward.1} parent=0 // pred_check_branch
    %27 = sbr.rel (0) target = $region29
  $region28: #{policy_forward.1} parent=0 // pred_region
    _
  $region29: #{policy_forward.1} parent=0 // pred_fallthru
    _
  // Predicated region
  $region30: #{policy_forward.1} parent=0 // pred_check
    _
  $region31: #{policy_forward.1} parent=0 // pred_check_branch
    %29 = sbr.rel (0) target = $region33
  $region32: #{policy_forward.1} parent=0 // pred_region
    _
  $region33: #{policy_forward.1} parent=0 // pred_fallthru
    _
  // Predicated region
  $region34: #{policy_forward.1} parent=0 // pred_check
    _
  $region35: #{policy_forward.1} parent=0 // pred_check_branch
    %31 = sbr.rel (0) target = $region37
  $region36: #{policy_forward.1} parent=0 // pred_region
    _
  $region37: #{policy_forward.1} parent=0 // pred_fallthru
    _
  %v33 = vld [vmem:[%s0] sm:$0xf]
  %v34 = vld [vmem:[%s1] sm:$0xf]
  %v35 = vld [vmem:[%s2] sm:$0x1]
  %v37 = vlaneseq
  %v38 = vshrl.u32 %v37, 7
  %v39 = vsub.s32 0, %v38
  %v40 = vrot.slane %v35, %v39
  %vm42 = vcmask 64512
  %v44 = vsel %vm42, %v33, 0
  %vm46 = vcmask 1043456
  %v48 = vsel %vm46, %v34, 0
  %50 = vmatprep.subr.bf16.mxu0 0
  %51 = vmatpush1.bf16.msra.mxu0 0
  %52 = vmatprep.subr.bf16.mxu0 0
  %53 = vmatpush1.bf16.msra.mxu0 0
  %54 = vmatprep.subr.bf16.mxu0 0
  %55 = vmatpush1.bf16.msra.mxu0 0
  %56 = vmatprep.subr.bf16.mxu0 0
  %57 = vmatpush1.bf16.msra.mxu0 0
  %58 = vmatprep.subr.bf16.mxu0 0
  %59 = vmatpush1.bf16.msra.mxu0 0
  %60 = vmatprep.subr.bf16.mxu0 0
  %61 = vmatpush1.bf16.msra.mxu0 0
  %62 = vmatprep.subr.bf16.mxu0 0
  %63 = vmatpush1.bf16.msra.mxu0 0
  %64 = vmatprep.subr.bf16.mxu0 0
  %65 = vmatpush1.bf16.msra.mxu0 %v48
  %66 = vmatprep.subr.bf16.mxu0 0
  %67 = vmatpush2.bf16.msra.mxu0 0
  %68 = vmatprep.subr.bf16.mxu0 0
  %69 = vmatpush2.bf16.msra.mxu0 0
  %70 = vmatprep.subr.bf16.mxu0 0
  %71 = vmatpush2.bf16.msra.mxu0 0
  %72 = vmatprep.subr.bf16.mxu0 0
  %73 = vmatpush2.bf16.msra.mxu0 0
  %74 = vmatprep.subr.bf16.mxu0 0
  %75 = vmatpush2.bf16.msra.mxu0 0
  %76 = vmatprep.subr.bf16.mxu0 0
  %77 = vmatpush2.bf16.msra.mxu0 0
  %78 = vmatprep.subr.bf16.mxu0 0
  %79 = vmatpush2.bf16.msra.mxu0 0
  %80 = vmatprep.subr.bf16.mxu0 0
  %81 = vmatpush2.bf16.msra.mxu0 0
  %82 = vmatprep.mubr.bf16.mxu0 0
  %83 = vmatmul.mubr.bf16.gmra.mxu0 %v44
  %v84 = vpop.f32.mrf.mxu0
  %v85 = vadd.f32 %v40, %v84
  %v86 = vpop.f32.mrf.mxu0
  %v87 = vpop.f32.mrf.mxu0
  %v88 = vpop.f32.mrf.mxu0
  %89 = vdwg.mxu0
  %v90 = vmax.f32 %v85, 0.0
  %v91 = vpack.c.bf16 %v90, %v90
  %v92 = vld [vmem:[%s3] sm:$0xf]
  %v93 = vld [vmem:[%s3 + $0x4] sm:$0xf]
  %v94 = vld [vmem:[%s3 + $0x8] sm:$0xf]
  %v95 = vld [vmem:[%s3 + $0xc] sm:$0xf]
  %v96 = vld [vmem:[%s3 + $0x10] sm:$0xf]
  %v97 = vld [vmem:[%s3 + $0x14] sm:$0xf]
  %v98 = vld [vmem:[%s3 + $0x18] sm:$0xf]
  %v99 = vld [vmem:[%s3 + $0x1c] sm:$0xf]
  %v100 = vld [vmem:[%s4] sm:$0x1]
  %v102 = vlaneseq
  %v103 = vshrl.u32 %v102, 7
  %v104 = vsub.s32 0, %v103
  %v105 = vrot.slane %v100, %v104
  %v115 = vunpack.c.l.b16 %v92
  %v116 = vunpack.c.l.b16 %v93
  %v117 = vunpack.c.l.b16 %v94
  %v118 = vunpack.c.l.b16 %v95
  %v119 = vunpack.c.l.b16 %v96
  %v120 = vunpack.c.l.b16 %v97
  %v121 = vunpack.c.l.b16 %v98
  %v122 = vunpack.c.l.b16 %v99
  %v123 = vpack.c.b16 %v116, %v115
  %v124 = vpack.c.b16 %v118, %v117
  %v125 = vpack.c.b16 %v120, %v119
  %v126 = vpack.c.b16 %v122, %v121
  %vm131 = vcmask 523264
  %v133 = vsel %vm131, %v91, 0
  %135 = vmatprep.subr.bf16.mxu0 0
  %136 = vmatpush1.bf16.msra.mxu0 0
  %137 = vmatprep.subr.bf16.mxu0 0
  %138 = vmatpush1.bf16.msra.mxu0 0
  %139 = vmatprep.subr.bf16.mxu0 0
  %140 = vmatpush1.bf16.msra.mxu0 0
  %141 = vmatprep.subr.bf16.mxu0 0
  %142 = vmatpush1.bf16.msra.mxu0 0
  %143 = vmatprep.subr.bf16.mxu0 0
  %144 = vmatpush1.bf16.msra.mxu0 %v126
  %145 = vmatprep.subr.bf16.mxu0 0
  %146 = vmatpush1.bf16.msra.mxu0 %v125
  %147 = vmatprep.subr.bf16.mxu0 0
  %148 = vmatpush1.bf16.msra.mxu0 %v124
  %149 = vmatprep.subr.bf16.mxu0 0
  %150 = vmatpush1.bf16.msra.mxu0 %v123
  %151 = vmatprep.subr.bf16.mxu0 0
  %152 = vmatpush2.bf16.msra.mxu0 0
  %153 = vmatprep.subr.bf16.mxu0 0
  %154 = vmatpush2.bf16.msra.mxu0 0
  %155 = vmatprep.subr.bf16.mxu0 0
  %156 = vmatpush2.bf16.msra.mxu0 0
  %157 = vmatprep.subr.bf16.mxu0 0
  %158 = vmatpush2.bf16.msra.mxu0 0
  %159 = vmatprep.subr.bf16.mxu0 0
  %160 = vmatpush2.bf16.msra.mxu0 0
  %161 = vmatprep.subr.bf16.mxu0 0
  %162 = vmatpush2.bf16.msra.mxu0 0
  %163 = vmatprep.subr.bf16.mxu0 0
  %164 = vmatpush2.bf16.msra.mxu0 0
  %165 = vmatprep.subr.bf16.mxu0 0
  %166 = vmatpush2.bf16.msra.mxu0 0
  %167 = vmatprep.mubr.bf16.mxu0 0
  %168 = vmatmul.mubr.bf16.gmra.mxu0 %v133
  %v169 = vpop.f32.mrf.mxu0
  %v170 = vadd.f32 %v105, %v169
  %v171 = vpop.f32.mrf.mxu0
  %v172 = vpop.f32.mrf.mxu0
  %v173 = vpop.f32.mrf.mxu0
  %174 = vdwg.mxu0
  %v175 = vmax.f32 %v170, 0.0
  %v176 = vpack.c.bf16 %v175, %v175
  %v177 = vld [vmem:[%s5] sm:$0xf]
  %v178 = vld [vmem:[%s5 + $0x4] sm:$0xf]
  %v179 = vld [vmem:[%s5 + $0x8] sm:$0xf]
  %v180 = vld [vmem:[%s5 + $0xc] sm:$0xf]
  %v181 = vld [vmem:[%s5 + $0x10] sm:$0xf]
  %v182 = vld [vmem:[%s5 + $0x14] sm:$0xf]
  %v183 = vld [vmem:[%s5 + $0x18] sm:$0xf]
  %v184 = vld [vmem:[%s5 + $0x1c] sm:$0xf]
  %v185 = vld [vmem:[%s5 + $0x20] sm:$0xf]
  %v186 = vld [vmem:[%s5 + $0x24] sm:$0xf]
  %v187 = vld [vmem:[%s5 + $0x28] sm:$0xf]
  %v188 = vld [vmem:[%s5 + $0x2c] sm:$0xf]
  %v189 = vld [vmem:[%s5 + $0x30] sm:$0xf]
  %v190 = vld [vmem:[%s5 + $0x34] sm:$0xf]
  %v191 = vld [vmem:[%s5 + $0x38] sm:$0xf]
  %v192 = vld [vmem:[%s5 + $0x3c] sm:$0xf]
  %v193 = vld [vmem:[%s6] sm:$0x1]
  %v195 = vlaneseq
  %v196 = vshrl.u32 %v195, 7
  %v197 = vsub.s32 0, %v196
  %v198 = vrot.slane %v193, %v197
  %v216 = vunpack.c.l.b16 %v177
  %v217 = vunpack.c.l.b16 %v178
  %v218 = vunpack.c.l.b16 %v179
  %v219 = vunpack.c.l.b16 %v180
  %v220 = vunpack.c.l.b16 %v181
  %v221 = vunpack.c.l.b16 %v182
  %v222 = vunpack.c.l.b16 %v183
  %v223 = vunpack.c.l.b16 %v184
  %v224 = vunpack.c.l.b16 %v185
  %v225 = vunpack.c.l.b16 %v186
  %v226 = vunpack.c.l.b16 %v187
  %v227 = vunpack.c.l.b16 %v188
  %v228 = vunpack.c.l.b16 %v189
  %v229 = vunpack.c.l.b16 %v190
  %v230 = vunpack.c.l.b16 %v191
  %v231 = vunpack.c.l.b16 %v192
  %v232 = vpack.c.b16 %v217, %v216
  %v233 = vpack.c.b16 %v219, %v218
  %v234 = vpack.c.b16 %v221, %v220
  %v235 = vpack.c.b16 %v223, %v222
  %v236 = vpack.c.b16 %v225, %v224
  %v237 = vpack.c.b16 %v227, %v226
  %v238 = vpack.c.b16 %v229, %v228
  %v239 = vpack.c.b16 %v231, %v230
  %248 = vmatprep.subr.bf16.mxu0 0
  %249 = vmatpush1.bf16.msra.mxu0 %v239
  %250 = vmatprep.subr.bf16.mxu0 0
  %251 = vmatpush1.bf16.msra.mxu0 %v238
  %252 = vmatprep.subr.bf16.mxu0 0
  %253 = vmatpush1.bf16.msra.mxu0 %v237
  %254 = vmatprep.subr.bf16.mxu0 0
  %255 = vmatpush1.bf16.msra.mxu0 %v236
  %256 = vmatprep.subr.bf16.mxu0 0
  %257 = vmatpush1.bf16.msra.mxu0 %v235
  %258 = vmatprep.subr.bf16.mxu0 0
  %259 = vmatpush1.bf16.msra.mxu0 %v234
  %260 = vmatprep.subr.bf16.mxu0 0
  %261 = vmatpush1.bf16.msra.mxu0 %v233
  %262 = vmatprep.subr.bf16.mxu0 0
  %263 = vmatpush1.bf16.msra.mxu0 %v232
  %264 = vmatprep.subr.bf16.mxu0 0
  %265 = vmatpush2.bf16.msra.mxu0 0
  %266 = vmatprep.subr.bf16.mxu0 0
  %267 = vmatpush2.bf16.msra.mxu0 0
  %268 = vmatprep.subr.bf16.mxu0 0
  %269 = vmatpush2.bf16.msra.mxu0 0
  %270 = vmatprep.subr.bf16.mxu0 0
  %271 = vmatpush2.bf16.msra.mxu0 0
  %272 = vmatprep.subr.bf16.mxu0 0
  %273 = vmatpush2.bf16.msra.mxu0 0
  %274 = vmatprep.subr.bf16.mxu0 0
  %275 = vmatpush2.bf16.msra.mxu0 0
  %276 = vmatprep.subr.bf16.mxu0 0
  %277 = vmatpush2.bf16.msra.mxu0 0
  %278 = vmatprep.subr.bf16.mxu0 0
  %279 = vmatpush2.bf16.msra.mxu0 0
  %280 = vmatprep.mubr.bf16.mxu0 0
  %281 = vmatmul.mubr.bf16.gmra.mxu0 %v176
  %v282 = vpop.f32.mrf.mxu0
  %v283 = vadd.f32 %v198, %v282
  %v284 = vpop.f32.mrf.mxu0
  %v285 = vpop.f32.mrf.mxu0
  %v286 = vpop.f32.mrf.mxu0
  %287 = vdwg.mxu0
  %v288 = vmax.f32 %v283, 0.0
  %v289 = vpack.c.bf16 %v288, %v288
  %v290 = vld [vmem:[%s7] sm:$0xf]
  %v291 = vld [vmem:[%s7 + $0x4] sm:$0xf]
  %v292 = vld [vmem:[%s7 + $0x8] sm:$0xf]
  %v293 = vld [vmem:[%s7 + $0xc] sm:$0xf]
  %v294 = vld [vmem:[%s7 + $0x10] sm:$0xf]
  %v295 = vld [vmem:[%s7 + $0x14] sm:$0xf]
  %v296 = vld [vmem:[%s7 + $0x18] sm:$0xf]
  %v297 = vld [vmem:[%s7 + $0x1c] sm:$0xf]
  %v298 = vld [vmem:[%s8] sm:$0x1]
  %v300 = vlaneseq
  %v301 = vshrl.u32 %v300, 7
  %v302 = vsub.s32 0, %v301
  %v303 = vrot.slane %v298, %v302
  %v313 = vunpack.c.l.b16 %v290
  %v314 = vunpack.c.l.b16 %v291
  %v315 = vunpack.c.l.b16 %v292
  %v316 = vunpack.c.l.b16 %v293
  %v317 = vunpack.c.l.b16 %v294
  %v318 = vunpack.c.l.b16 %v295
  %v319 = vunpack.c.l.b16 %v296
  %v320 = vunpack.c.l.b16 %v297
  %v321 = vpack.c.b16 %v314, %v313
  %v322 = vpack.c.b16 %v316, %v315
  %v323 = vpack.c.b16 %v318, %v317
  %v324 = vpack.c.b16 %v320, %v319
  %v330 = vsel %vm131, %v289, 0
  %332 = vmatprep.subr.bf16.mxu0 0
  %333 = vmatpush1.bf16.msra.mxu0 0
  %334 = vmatprep.subr.bf16.mxu0 0
  %335 = vmatpush1.bf16.msra.mxu0 0
  %336 = vmatprep.subr.bf16.mxu0 0
  %337 = vmatpush1.bf16.msra.mxu0 0
  %338 = vmatprep.subr.bf16.mxu0 0
  %339 = vmatpush1.bf16.msra.mxu0 0
  %340 = vmatprep.subr.bf16.mxu0 0
  %341 = vmatpush1.bf16.msra.mxu0 %v324
  %342 = vmatprep.subr.bf16.mxu0 0
  %343 = vmatpush1.bf16.msra.mxu0 %v323
  %344 = vmatprep.subr.bf16.mxu0 0
  %345 = vmatpush1.bf16.msra.mxu0 %v322
  %346 = vmatprep.subr.bf16.mxu0 0
  %347 = vmatpush1.bf16.msra.mxu0 %v321
  %348 = vmatprep.subr.bf16.mxu0 0
  %349 = vmatpush2.bf16.msra.mxu0 0
  %350 = vmatprep.subr.bf16.mxu0 0
  %351 = vmatpush2.bf16.msra.mxu0 0
  %352 = vmatprep.subr.bf16.mxu0 0
  %353 = vmatpush2.bf16.msra.mxu0 0
  %354 = vmatprep.subr.bf16.mxu0 0
  %355 = vmatpush2.bf16.msra.mxu0 0
  %356 = vmatprep.subr.bf16.mxu0 0
  %357 = vmatpush2.bf16.msra.mxu0 0
  %358 = vmatprep.subr.bf16.mxu0 0
  %359 = vmatpush2.bf16.msra.mxu0 0
  %360 = vmatprep.subr.bf16.mxu0 0
  %361 = vmatpush2.bf16.msra.mxu0 0
  %362 = vmatprep.subr.bf16.mxu0 0
  %363 = vmatpush2.bf16.msra.mxu0 0
  %364 = vmatprep.mubr.bf16.mxu0 0
  %365 = vmatmul.mubr.bf16.gmra.mxu0 %v330
  %v366 = vpop.f32.mrf.mxu0
  %v367 = vadd.f32 %v303, %v366
  %v368 = vpop.f32.mrf.mxu0
  %v369 = vpop.f32.mrf.mxu0
  %v370 = vpop.f32.mrf.mxu0
  %371 = vdwg.mxu0
  %372 = vst [vmem:[%s9] sm:$0xff] %v367
  // Predicated region
  $region38: #{policy_forward.1} parent=0 // pred_check
    _
  $region39: #{policy_forward.1} parent=0 // pred_check_branch
    %374 = sbr.rel (0) target = $region41
  $region40: #{policy_forward.1} parent=0 // pred_region
    _
  $region41: #{policy_forward.1} parent=0 // pred_fallthru
    _
  // Predicated region
  $region42: #{policy_forward.1} parent=0 // pred_check
    _
  $region43: #{policy_forward.1} parent=0 // pred_check_branch
    %376 = sbr.rel (0) target = $region45
  $region44: #{policy_forward.1} parent=0 // pred_region
    _
  $region45: #{policy_forward.1} parent=0 // pred_fallthru
    _

</llo_original>
